<compile_context>
chip_gen: v6e
topology: v6e:2x2x1
jax: 0.10.0
libtpu: 0.0.40
codegen_flags: <defaults>
</compile_context>

<pallas_src>
import jax
import jax.numpy as jnp
from jax import lax
from jax.experimental import pallas as pl
from jax.experimental.pallas import tpu as pltpu


def _round_up(x: int, m: int) -> int:
    return (x + m - 1) // m * m


def _make_cox_kernel(tj: int, n_chunks: int):
    """Builds the per-row-tile kernel (tj / n_chunks are static Python ints)."""

    def kernel(theta_row_ref, surv_row_ref, surv_col_ref, theta_col_ref,
               censor_col_ref, out_ref):
        surv_col = surv_col_ref[...]          # (tm, 1) survtime_i for this row tile
        tm = surv_col.shape[0]

        if n_chunks == 1:
            # Small batch: a single chunk covers the whole (padded) row.
            theta_row = theta_row_ref[...]                     # (1, n_pad)
            m = jnp.max(theta_row)                             # padded entries are -inf
            e = jnp.exp(theta_row - m)                         # (1, n_pad), EUP
            # Fused mask + select: one VPU select per element, no float R matrix.
            masked = jnp.where(surv_row_ref[...] >= surv_col, e, 0.0)
            risk = jnp.sum(masked, axis=1, keepdims=True)      # (tm, 1)
        else:
            # Pass 1: numerically-stable shift m = max(theta), chunked over lanes.
            def max_body(c, mm):
                j0 = pl.multiple_of(c * tj, tj)
                return jnp.maximum(mm, jnp.max(theta_row_ref[:, pl.ds(j0, tj)]))

            m = lax.fori_loop(0, n_chunks, max_body,
                              jnp.array(-jnp.inf, dtype=jnp.float32))

            # Pass 2: masked risk sum, one (tm, tj) block at a time.
            def body(c, risk):
                j0 = pl.multiple_of(c * tj, tj)
                th = theta_row_ref[:, pl.ds(j0, tj)]           # (1, tj)
                sv = surv_row_ref[:, pl.ds(j0, tj)]            # (1, tj)
                e = jnp.exp(th - m)                            # EUP
                masked = jnp.where(sv >= surv_col, e, 0.0)     # single VPU select
                return risk + jnp.sum(masked, axis=1, keepdims=True)

            risk = lax.fori_loop(0, n_chunks, body,
                                 jnp.zeros((tm, 1), jnp.float32))

        # Column-oriented epilogue (no transpose); per-row censored terms out.
        log_risk = m + jnp.log(risk)                           # (tm, 1)
        out_ref[...] = (theta_col_ref[...] - log_risk) * censor_col_ref[...]

    return kernel


def cox_loss(hazard_pred, survtime, censor, *, row_block=256, lane_block=256):
    """Pallas TPU implementation of CoxLoss.forward.

    hazard_pred: (N, 1) or (N,) float
    survtime:    (N,)    float
    censor:      (N,)    float
    returns scalar float32 loss  ==  -mean((theta_i - log sum_j exp(theta_j) R_ij) * censor_i)
    """
    theta = jnp.reshape(hazard_pred, (-1,)).astype(jnp.float32)
    surv = jnp.reshape(jnp.asarray(survtime, jnp.float32), (-1,))
    cens = jnp.reshape(jnp.asarray(censor, jnp.float32), (-1,))
    n = theta.shape[0]

    # Tile sizes: single tile / single chunk for small batches, (256, 256) else.
    tm = _round_up(n, 8) if n <= row_block else row_block
    n_pad = _round_up(n, tm)
    tj = lane_block if n_pad > lane_block else n_pad
    if n_pad % tj != 0:            # only reachable with non-default block sizes
        tj = tm
    n_chunks = n_pad // tj
    pad = n_pad - n

    # Padding scheme:
    #   survtime -> -inf : padded columns never satisfy surv_j >= surv_i for any
    #                      real row; padded rows get a finite positive risk.
    #   theta_row -> -inf: exp(theta_pad - m) == 0 exactly.
    #   theta_col -> 0, censor -> 0: padded rows contribute exactly 0 terms.
    theta_row = jnp.pad(theta, (0, pad), constant_values=-jnp.inf).reshape(1, n_pad)
    surv_pad = jnp.pad(surv, (0, pad), constant_values=-jnp.inf)
    surv_row = surv_pad.reshape(1, n_pad)
    surv_col = surv_pad.reshape(n_pad, 1)
    theta_col = jnp.pad(theta, (0, pad), constant_values=0.0).reshape(n_pad, 1)
    censor_col = jnp.pad(cens, (0, pad), constant_values=0.0).reshape(n_pad, 1)

    terms = pl.pallas_call(
        _make_cox_kernel(tj, n_chunks),
        out_shape=jax.ShapeDtypeStruct((n_pad, 1), jnp.float32),
        grid=(n_pad // tm,),
        in_specs=[
            pl.BlockSpec((1, n_pad), lambda i: (0, 0)),   # theta    (row, shared)
            pl.BlockSpec((1, n_pad), lambda i: (0, 0)),   # survtime (row, shared)
            pl.BlockSpec((tm, 1), lambda i: (i, 0)),      # survtime (column tile)
            pl.BlockSpec((tm, 1), lambda i: (i, 0)),      # theta    (column tile)
            pl.BlockSpec((tm, 1), lambda i: (i, 0)),      # censor   (column tile)
        ],
        out_specs=pl.BlockSpec((tm, 1), lambda i: (i, 0)),
        compiler_params=pltpu.CompilerParams(
            dimension_semantics=("parallel",)),
    )(theta_row, surv_row, surv_col, theta_col, censor_col)

    return -jnp.sum(terms[:n, 0]) / jnp.float32(n)


def cox_loss_ref(hazard_pred, survtime, censor):
    # Pure-JAX reference mirroring the PyTorch forward.
    theta = jnp.reshape(hazard_pred, (-1,)).astype(jnp.float32)
    surv = jnp.asarray(survtime, jnp.float32).reshape(-1)
    cens = jnp.asarray(censor, jnp.float32).reshape(-1)
    r_mat = (surv[None, :] >= surv[:, None]).astype(jnp.float32)
    exp_theta = jnp.exp(theta)
    log_risk = jnp.log(jnp.sum(exp_theta[None, :] * r_mat, axis=1))
    return -jnp.mean((theta - log_risk) * cens)


if __name__ == "__main__":
    key = jax.random.PRNGKey(0)
    k1, k2, k3, k4, k5, k6 = jax.random.split(key, 6)

    # Small demo shape (single row-tile, single lane-chunk path).
    N = 8
    hazard_pred = jax.random.normal(k1, (N, 1), dtype=jnp.float32)
    survtime = jax.random.uniform(k2, (N,), dtype=jnp.float32, minval=0.0, maxval=10.0)
    censor = (jax.random.uniform(k3, (N,)) > 0.3).astype(jnp.float32)

    loss = jax.block_until_ready(cox_loss(hazard_pred, survtime, censor))
    ref = jax.block_until_ready(cox_loss_ref(hazard_pred, survtime, censor))
    assert jnp.allclose(loss, ref, atol=1e-5, rtol=1e-4), (loss, ref)

    # Larger batch exercising the tiled path (grid > 1, chunked j-loop, padding).
    N2 = 300
    hp2 = jax.random.normal(k4, (N2, 1), dtype=jnp.float32)
    st2 = jax.random.uniform(k5, (N2,), dtype=jnp.float32, minval=0.0, maxval=10.0)
    cs2 = (jax.random.uniform(k6, (N2,)) > 0.3).astype(jnp.float32)
    loss2 = jax.block_until_ready(cox_loss(hp2, st2, cs2))
    ref2 = jax.block_until_ready(cox_loss_ref(hp2, st2, cs2))
    assert jnp.allclose(loss2, ref2, atol=1e-5, rtol=1e-4), (loss2, ref2)

    print("KERNEL_OK")
</pallas_src>

<mosaic_0001>
module attributes {stable_mosaic.version = 11 : i64} {
  func.func @kernel(%arg0: i32, %arg1: memref<1x8xf32, #tpu.memory_space<vmem>>, %arg2: memref<1x8xf32, #tpu.memory_space<vmem>>, %arg3: memref<8x1xf32, #tpu.memory_space<vmem>>, %arg4: memref<8x1xf32, #tpu.memory_space<vmem>>, %arg5: memref<8x1xf32, #tpu.memory_space<vmem>>, %arg6: memref<8x1xf32, #tpu.memory_space<vmem>>) attributes {dimension_semantics = [#tpu.dimension_semantics<parallel>], iteration_bounds = array<i64: 1>, scalar_prefetch = 0 : i64, scratch_operands = 0 : i64, tpu.core_type = #tpu.core_type<tc>, window_params = [{pipeline_mode = #tpu.pipeline_mode<synchronous>, transform_indices = @transform_0, window_bounds = array<i64: 1, 8>}, {pipeline_mode = #tpu.pipeline_mode<synchronous>, transform_indices = @transform_1, window_bounds = array<i64: 1, 8>}, {transform_indices = @transform_2, window_bounds = array<i64: 8, 1>}, {transform_indices = @transform_3, window_bounds = array<i64: 8, 1>}, {transform_indices = @transform_4, window_bounds = array<i64: 8, 1>}, {transform_indices = @transform_5, window_bounds = array<i64: 8, 1>}]} {
    %c0 = arith.constant 0 : index
    %c0_0 = arith.constant 0 : index
    %0 = vector.load %arg3[%c0, %c0_0] : memref<8x1xf32, #tpu.memory_space<vmem>>, vector<8x1xf32>
    %c0_1 = arith.constant 0 : index
    %c0_2 = arith.constant 0 : index
    %1 = vector.load %arg1[%c0_1, %c0_2] : memref<1x8xf32, #tpu.memory_space<vmem>>, vector<1x8xf32>
    %2 = vector.shape_cast %1 : vector<1x8xf32> to vector<1x1x8xf32>
    %cst = arith.constant dense<0xFF800000> : vector<1xf32>
    %3 = vector.multi_reduction <maximumf>, %2, %cst [1, 2] : vector<1x1x8xf32> to vector<1xf32>
    %4 = vector.shape_cast %3 : vector<1xf32> to vector<1x1x1xf32>
    %5 = vector.extract %4[0, 0, 0] : f32 from vector<1x1x1xf32>
    %6 = vector.broadcast %5 : f32 to vector<1x8xf32>
    %7 = arith.subf %1, %6 : vector<1x8xf32>
    %8 = math.exp %7 : vector<1x8xf32>
    %c0_3 = arith.constant 0 : index
    %c0_4 = arith.constant 0 : index
    %9 = vector.load %arg2[%c0_3, %c0_4] : memref<1x8xf32, #tpu.memory_space<vmem>>, vector<1x8xf32>
    %10 = vector.broadcast %9 : vector<1x8xf32> to vector<8x8xf32>
    %11 = vector.broadcast %0 : vector<8x1xf32> to vector<8x8xf32>
    %12 = arith.cmpf oge, %10, %11 : vector<8x8xf32>
    %cst_5 = arith.constant 0.000000e+00 : f32
    %13 = vector.shape_cast %8 : vector<1x8xf32> to vector<1x8xf32>
    %14 = vector.broadcast %13 : vector<1x8xf32> to vector<8x8xf32>
    %15 = vector.broadcast %cst_5 : f32 to vector<8x8xf32>
    %16 = arith.select %12, %14, %15 : vector<8x8xi1>, vector<8x8xf32>
    %cst_6 = arith.constant dense<0.000000e+00> : vector<8xf32>
    %17 = vector.multi_reduction <add>, %16, %cst_6 [1] : vector<8x8xf32> to vector<8xf32>
    %18 = vector.shape_cast %17 : vector<8xf32> to vector<8x1xf32>
    %19 = math.log %18 : vector<8x1xf32>
    %20 = vector.broadcast %5 : f32 to vector<8x1xf32>
    %21 = arith.addf %20, %19 : vector<8x1xf32>
    %c0_7 = arith.constant 0 : index
    %c0_8 = arith.constant 0 : index
    %22 = vector.load %arg4[%c0_7, %c0_8] : memref<8x1xf32, #tpu.memory_space<vmem>>, vector<8x1xf32>
    %23 = arith.subf %22, %21 : vector<8x1xf32>
    %c0_9 = arith.constant 0 : index
    %c0_10 = arith.constant 0 : index
    %24 = vector.load %arg5[%c0_9, %c0_10] : memref<8x1xf32, #tpu.memory_space<vmem>>, vector<8x1xf32>
    %25 = arith.mulf %23, %24 : vector<8x1xf32>
    %c0_11 = arith.constant 0 : index
    %c0_12 = arith.constant 0 : index
    %26 = vector.load %arg6[%c0_11, %c0_12] : memref<8x1xf32, #tpu.memory_space<vmem>>, vector<8x1xf32>
    tpu.vector_store %arg6[%c0_11, %c0_12], %25 {strides = array<i32>} : memref<8x1xf32, #tpu.memory_space<vmem>>, vector<8x1xf32>,
    return
  }
  func.func @transform_0(%arg0: i32) -> (i32, i32) {
    %c0_i32 = arith.constant 0 : i32
    %c0_i32_0 = arith.constant 0 : i32
    %c0_i32_1 = arith.constant 0 : i32
    return %c0_i32, %c0_i32_0 : i32, i32
  }
  func.func @transform_1(%arg0: i32) -> (i32, i32) {
    %c0_i32 = arith.constant 0 : i32
    %c0_i32_0 = arith.constant 0 : i32
    %c0_i32_1 = arith.constant 0 : i32
    return %c0_i32, %c0_i32_0 : i32, i32
  }
  func.func @transform_2(%arg0: i32) -> (i32, i32) {
    %c0_i32 = arith.constant 0 : i32
    %c0_i32_0 = arith.constant 0 : i32
    return %arg0, %c0_i32 : i32, i32
  }
  func.func @transform_3(%arg0: i32) -> (i32, i32) {
    %c0_i32 = arith.constant 0 : i32
    %c0_i32_0 = arith.constant 0 : i32
    return %arg0, %c0_i32 : i32, i32
  }
  func.func @transform_4(%arg0: i32) -> (i32, i32) {
    %c0_i32 = arith.constant 0 : i32
    %c0_i32_0 = arith.constant 0 : i32
    return %arg0, %c0_i32 : i32, i32
  }
  func.func @transform_5(%arg0: i32) -> (i32, i32) {
    %c0_i32 = arith.constant 0 : i32
    %c0_i32_0 = arith.constant 0 : i32
    return %arg0, %c0_i32 : i32, i32
  }
}

</mosaic_0001>

<llo_original>
// kernel: tpu_custom_call.1
$region0: #{tpu_custom_call.1}
  #allocation0 [shape = 'u32[]', space=smem, size = 0x4, offset = 0x4, fixed_abs, tag = 'smem constant byte address 0x4 - core index']
  #allocation1 [shape = 'u32[144,128]{1,0:T(1,128)}', space=vmem, size = 0x12000, scoped, tag = 'internal scratch']
  %s0 = inlined_call_operand.vmem [shape: f32[1,8], index: 0, kind: input, shape index: {}]
  %s1 = inlined_call_operand.vmem [shape: f32[1,8], index: 1, kind: input, shape index: {}]
  %s2 = inlined_call_operand.vmem [shape: f32[8,1], index: 2, kind: input, shape index: {}]
  %s3 = inlined_call_operand.vmem [shape: f32[8,1], index: 3, kind: input, shape index: {}]
  %s4 = inlined_call_operand.vmem [shape: f32[8,1], index: 4, kind: input, shape index: {}]
  %s5 = inlined_call_operand.vmem [shape: f32[8,1], index: 5, kind: output, shape index: {}]
  %s6 = sld [smem:[#allocation0]]
  $region30: #{tpu_custom_call.1} parent=0
    _
  %s8 = ssub.s32 1, %s6
  %s9 = scalar_select 0, %s8, %s6
  // Predicated region
  $region2: #{tpu_custom_call.1} parent=0 // pred_check
    _
  $region3: #{tpu_custom_call.1} parent=0 // pred_check_branch
    %11 = sbr.rel (0) target = $region5
  $region4: #{tpu_custom_call.1} parent=0 // pred_region
    _
  $region5: #{tpu_custom_call.1} parent=0 // pred_fallthru
    _
  // Predicated region
  $region6: #{tpu_custom_call.1} parent=0 // pred_check
    _
  $region7: #{tpu_custom_call.1} parent=0 // pred_check_branch
    %13 = sbr.rel (0) target = $region9
  $region8: #{tpu_custom_call.1} parent=0 // pred_region
    _
  $region9: #{tpu_custom_call.1} parent=0 // pred_fallthru
    _
  // Predicated region
  $region10: #{tpu_custom_call.1} parent=0 // pred_check
    _
  $region11: #{tpu_custom_call.1} parent=0 // pred_check_branch
    %15 = sbr.rel (0) target = $region13
  $region12: #{tpu_custom_call.1} parent=0 // pred_region
    _
  $region13: #{tpu_custom_call.1} parent=0 // pred_fallthru
    _
  // Predicated region
  $region14: #{tpu_custom_call.1} parent=0 // pred_check
    _
  $region15: #{tpu_custom_call.1} parent=0 // pred_check_branch
    %17 = sbr.rel (0) target = $region17
  $region16: #{tpu_custom_call.1} parent=0 // pred_region
    _
  $region17: #{tpu_custom_call.1} parent=0 // pred_fallthru
    _
  // Predicated region
  $region18: #{tpu_custom_call.1} parent=0 // pred_check
    _
  $region19: #{tpu_custom_call.1} parent=0 // pred_check_branch
    %19 = sbr.rel (0) target = $region21
  $region20: #{tpu_custom_call.1} parent=0 // pred_region
    _
  $region21: #{tpu_custom_call.1} parent=0 // pred_fallthru
    _
  %v20 = vld [vmem:[%s2] sm:$0xff]
  %v21 = vld [vmem:[%s0] sm:$0x1]
  %vm22 = vcmask 57344
  %v23 = vsel %vm22, %v21, -inf
  %24 = vmax.xlane.f32.xlu0 %v23
  %v25 = vpop.xlane.xlu0 %24
  %v26 = vrot.slane %v25, 4
  %v27 = vmax.f32 %v25, %v26
  %v28 = vrot.slane %v27, 2
  %v29 = vmax.f32 %v27, %v28
  %v30 = vrot.slane %v29, 1
  %v31 = vmax.f32 %v29, %v30
  %s32 = vtos %v31
  %v33 = vstv %s32
  %v34 = vsub.f32 %v21, %v33
  %v35 = vmul.f32 %v34, 1.442695
  %v36 = vpow.pop %v35
  %v37 = vld [vmem:[%s1] sm:$0x1]
  %v39 = vlaneseq
  %v40 = vshrl.u32 %v39, 7
  %v41 = vsub.s32 0, %v40
  %v42 = vrot.slane %v37, %v41
  %45 = vset.pattern.permute.xlu0 0
  %46 = vperm.xlu0 %45, %v20
  %v47 = vpop.permute.xlu0 %46
  %vm49 = vcmp.ge.f32.partialorder %v42, %v47
  %v51 = vlaneseq
  %v52 = vshrl.u32 %v51, 7
  %v53 = vsub.s32 0, %v52
  %v54 = vrot.slane %v36, %v53
  %v56 = vsel %vm49, %v54, 0.0
  %vm57 = vcmask 64512
  %v58 = vsel %vm57, %v56, 0.0
  %59 = vadd.xlane.f32.xlu0 %v58
  %v60 = vpop.xlane.xlu0 %59
  %v61 = vlog2.pop %v60
  %v62 = vmul.f32 %v61, 0.6931472
  %v63 = vadd.f32 %v33, %v62
  %v64 = vld [vmem:[%s3] sm:$0xff]
  %v65 = vsub.f32 %v64, %v63
  %v66 = vld [vmem:[%s4] sm:$0xff]
  %v67 = vmul.f32 %v65, %v66
  %vm68 = vcmask 7168
  %69 = vst.msk [vmem:[%s5] sm:$0xff] %vm68, %v67
  // Predicated region
  $region22: #{tpu_custom_call.1} parent=0 // pred_check
    _
  $region23: #{tpu_custom_call.1} parent=0 // pred_check_branch
    %71 = sbr.rel (0) target = $region25
  $region24: #{tpu_custom_call.1} parent=0 // pred_region
    _
  $region25: #{tpu_custom_call.1} parent=0 // pred_fallthru
    _
  // Predicated region
  $region26: #{tpu_custom_call.1} parent=0 // pred_check
    _
  $region27: #{tpu_custom_call.1} parent=0 // pred_check_branch
    %73 = sbr.rel (0) target = $region29
  $region28: #{tpu_custom_call.1} parent=0 // pred_region
    _
  $region29: #{tpu_custom_call.1} parent=0 // pred_fallthru
    _

</llo_original>
